<compile_context>
chip_gen: v7x
topology: tpu7x:2x2x1
jax: 0.10.0
libtpu: 0.0.40
codegen_flags: <defaults>
</compile_context>

<pallas_src>
import functools

import jax
import jax.numpy as jnp
from jax.experimental import pallas as pl
from jax.experimental.pallas import tpu as pltpu


# ----------------------------------------------------------------------------
# helpers
# ----------------------------------------------------------------------------
def _round_up(x: int, m: int) -> int:
    return (x + m - 1) // m * m


def _choose_tile(n: int, tn_max: int = 512):
    """Pick a lane-dense candidate tile (multiple of 128), >=2 grid steps when possible."""
    n_pad = _round_up(n, 128)
    tn = min(tn_max, n_pad)
    # Keep at least 2 grid steps so dimension_semantics=("parallel",) can shard
    # the candidate axis across both TensorCores on v7x.
    if n_pad // tn < 2 and n_pad >= 256:
        tn = max(128, (n_pad // 2) // 128 * 128)
    n_pad = _round_up(n_pad, tn)
    return tn, n_pad


def _complex_product(a, b, rank):
    """a, b: [B, 2R] (re | im).  Returns [xr | xi] as one [B, 2R] array."""
    ar, ai = a[:, :rank], a[:, rank:]
    br, bi = b[:, :rank], b[:, rank:]
    xr = ar * br - ai * bi
    xi = ai * br + ar * bi
    return jnp.concatenate([xr, xi], axis=1)


_DN_FULL_2R = (((1,), (1,)), ((), ()))   # contract the 2R dim; == x @ w.T


# ----------------------------------------------------------------------------
# Pallas kernels
# ----------------------------------------------------------------------------
def _loc_score_kernel(o_ref, t_ref, l_ref, w_ref,
                      s_ref, ro_ref, rt_ref, rl_ref, *, rank):
    """score tile [B, tn] = [xr|xi] @ w^T, plus the three regularizer magnitudes."""
    o = o_ref[...]                                       # [B, 2R]
    t = t_ref[...]                                       # [B, 2R]
    x = _complex_product(o, t, rank)                     # [B, 2R]
    s_ref[...] = jax.lax.dot_general(
        x, w_ref[...], _DN_FULL_2R, preferred_element_type=jnp.float32)

    # Regularizer magnitudes.  Written every tile with identical values (tiny
    # VPU/EUP work), so constant-index output blocks stay megacore-safe.
    l = l_ref[...]
    ro_ref[...] = jnp.sqrt(o[:, :rank] ** 2 + o[:, rank:] ** 2)
    rt_ref[...] = jnp.sqrt(t[:, :rank] ** 2 + t[:, rank:] ** 2)
    rl_ref[...] = jnp.sqrt(l[:, :rank] ** 2 + l[:, rank:] ** 2)


def _sim_score_kernel(u_ref, s_ref, w_ref, o_ref, *, rank):
    """sim_score tile [B, tn] = [xr|xi] @ w^T (lhs already L2-normalized)."""
    x = _complex_product(u_ref[...], s_ref[...], rank)
    o_ref[...] = jax.lax.dot_general(
        x, w_ref[...], _DN_FULL_2R, preferred_element_type=jnp.float32)


# ----------------------------------------------------------------------------
# pallas_call wrappers
# ----------------------------------------------------------------------------
def loc_score_and_regs(origin, tran, loc, right, *, rank, tn_max=512):
    """Returns ([B, N] score, (|origin|, |tran|, |loc|))."""
    B, R2 = origin.shape
    N = right.shape[0]
    tn, n_pad = _choose_tile(N, tn_max)
    if n_pad != N:                       # ragged vocab: pad with zero rows, slice after
        right = jnp.pad(right, ((0, n_pad - N), (0, 0)))

    lhs_spec = pl.BlockSpec((B, R2), lambda j: (0, 0))
    reg_spec = pl.BlockSpec((B, rank), lambda j: (0, 0))
    score, ro, rt, rl = pl.pallas_call(
        functools.partial(_loc_score_kernel, rank=rank),
        grid=(n_pad // tn,),
        in_specs=[lhs_spec, lhs_spec, lhs_spec,
                  pl.BlockSpec((tn, R2), lambda j: (j, 0))],
        out_specs=(pl.BlockSpec((B, tn), lambda j: (0, j)),
                   reg_spec, reg_spec, reg_spec),
        out_shape=(jax.ShapeDtypeStruct((B, n_pad), jnp.float32),
                   jax.ShapeDtypeStruct((B, rank), jnp.float32),
                   jax.ShapeDtypeStruct((B, rank), jnp.float32),
                   jax.ShapeDtypeStruct((B, rank), jnp.float32)),
        compiler_params=pltpu.CompilerParams(dimension_semantics=("parallel",)),
    )(origin, tran, loc, right)
    return score[:, :N], (ro, rt, rl)


def sim_score_fn(user1n, sim, right_sim, *, rank, tn_max=512):
    """Returns [B, N_user] similarity score (lhs already normalized)."""
    B, R2 = user1n.shape
    N = right_sim.shape[0]
    tn, n_pad = _choose_tile(N, tn_max)
    if n_pad != N:
        right_sim = jnp.pad(right_sim, ((0, n_pad - N), (0, 0)))

    lhs_spec = pl.BlockSpec((B, R2), lambda j: (0, 0))
    out = pl.pallas_call(
        functools.partial(_sim_score_kernel, rank=rank),
        grid=(n_pad // tn,),
        in_specs=[lhs_spec, lhs_spec,
                  pl.BlockSpec((tn, R2), lambda j: (j, 0))],
        out_specs=pl.BlockSpec((B, tn), lambda j: (0, j)),
        out_shape=jax.ShapeDtypeStruct((B, n_pad), jnp.float32),
        compiler_params=pltpu.CompilerParams(dimension_semantics=("parallel",)),
    )(user1n, sim, right_sim)
    return out[:, :N]


# ----------------------------------------------------------------------------
# jitted forward (single dispatch for the whole thing)
# ----------------------------------------------------------------------------
@functools.partial(jax.jit, static_argnames=("rank",))
def _rcomplex_forward(emb0, emb1, emb2, emb10, emb11, x, similar, *, rank):
    # Embedding gathers (glue).
    origin = jnp.take(emb0, x[:, 6], axis=0)        # [B, 2R]
    tran = jnp.take(emb1, x[:, 8], axis=0)          # [B, 2R]
    loc = jnp.take(emb2, x[:, 3], axis=0)           # [B, 2R]
    # NOTE: the reference's user_ratio split/concat of `tran` is an identity:
    # cat(t[:, :k], t[:, k:R]) == t[:, :R] and cat(t[:, R:R+k], t[:, R+k:]) == t[:, R:].
    user1 = jnp.take(emb10, similar[:, 0], axis=0)  # [B, 2R]
    sim = jnp.take(emb11, similar[:, 1], axis=0)    # [B, 2R]

    # F.normalize(user1, dim=1) hoisted out of the per-tile kernel path.
    # x / max(||x||, 1e-12) == x * rsqrt(max(||x||^2, 1e-24)).
    sq = jnp.sum(user1 * user1, axis=1, keepdims=True)
    user1 = user1 * jax.lax.rsqrt(jnp.maximum(sq, 1e-24))

    score, regs = loc_score_and_regs(origin, tran, loc, emb2, rank=rank)
    sim_sc = sim_score_fn(user1, sim, emb10, rank=rank)
    return score, sim_sc, regs


# ----------------------------------------------------------------------------
# RComplEx model (forward only)
# ----------------------------------------------------------------------------
class RComplExPallas:
    # embeddings[i] has vocab size taken from this index into `sizes`
    _EMB_SIZE_IDX = (2, 6, 2, 5, 3, 4, 4, 4, 1, 1, 0, 7)

    def __init__(self, sizes, rank, user_ratio, init_size=0.001, key=None):
        self.sizes = sizes
        self.rank = rank
        self.user_ratio = user_ratio
        if key is None:
            key = jax.random.PRNGKey(0)
        keys = jax.random.split(key, len(self._EMB_SIZE_IDX))
        # nn.Embedding default init = N(0, 1); every table is scaled by init_size.
        self.embeddings = [
            init_size * jax.random.normal(k, (sizes[i], 2 * rank), dtype=jnp.float32)
            for k, i in zip(keys, self._EMB_SIZE_IDX)
        ]

    def forward(self, x, similar):
        return _rcomplex_forward(
            self.embeddings[0], self.embeddings[1], self.embeddings[2],
            self.embeddings[10], self.embeddings[11],
            x, similar, rank=self.rank)

    # ---- pure-JAX reference for verification ----
    @staticmethod
    def _split(e, rank):
        return e[:, :rank], e[:, rank:]

    def forward_ref(self, x, similar):
        R = self.rank
        origin = jnp.take(self.embeddings[0], x[:, 6], axis=0)
        tran = jnp.take(self.embeddings[1], x[:, 8], axis=0)
        loc = jnp.take(self.embeddings[2], x[:, 3], axis=0)
        right = self.embeddings[2]
        o_r, o_i = self._split(origin, R)
        t_r, t_i = self._split(tran, R)
        l_r, l_i = self._split(loc, R)
        w_r, w_i = self._split(right, R)
        user1 = jnp.take(self.embeddings[10], similar[:, 0], axis=0)
        denom = jnp.maximum(jnp.linalg.norm(user1, axis=1, keepdims=True), 1e-12)
        user1 = user1 / denom
        sim = jnp.take(self.embeddings[11], similar[:, 1], axis=0)
        right_sim = self.embeddings[10]
        u_r, u_i = self._split(user1, R)
        s_r, s_i = self._split(sim, R)
        ws_r, ws_i = self._split(right_sim, R)
        score = (o_r * t_r - o_i * t_i) @ w_r.T + (o_i * t_r + o_r * t_i) @ w_i.T
        sim_score = (u_r * s_r - u_i * s_i) @ ws_r.T + (u_i * s_r + u_r * s_i) @ ws_i.T
        regs = (jnp.sqrt(o_r**2 + o_i**2), jnp.sqrt(t_r**2 + t_i**2),
                jnp.sqrt(l_r**2 + l_i**2))
        return score, sim_score, regs


# ----------------------------------------------------------------------------
if __name__ == "__main__":
    # sizes = (n_users, s1, n_locations, s3, s4, s5, s6, s7) — only 0, 2, 6, 7
    # are touched by forward().  n_users=100 is deliberately NOT a multiple of
    # 128 to exercise the ragged-tile padding path.
    sizes = (100, 10, 256, 12, 13, 14, 16, 128)
    rank = 32
    batch = 8

    model = RComplExPallas(sizes, rank, user_ratio=0.5,
                           key=jax.random.PRNGKey(0))

    kx, ks = jax.random.split(jax.random.PRNGKey(42))
    # x columns used: 3 (loc), 6 (origin, vocab=sizes[2]), 8 (tran, vocab=sizes[6])
    x = jnp.zeros((batch, 9), dtype=jnp.int32)
    x = x.at[:, 6].set(jax.random.randint(kx, (batch,), 0, sizes[2]))
    x = x.at[:, 8].set(jax.random.randint(jax.random.fold_in(kx, 1), (batch,), 0, sizes[6]))
    x = x.at[:, 3].set(jax.random.randint(jax.random.fold_in(kx, 2), (batch,), 0, sizes[2]))
    similar = jnp.stack(
        [jax.random.randint(ks, (batch,), 0, sizes[0]),
         jax.random.randint(jax.random.fold_in(ks, 1), (batch,), 0, sizes[7])],
        axis=1).astype(jnp.int32)

    score, sim_score, regs = model.forward(x, similar)
    jax.block_until_ready((score, sim_score, regs))

    # Verify against the pure-JAX reference.
    score_r, sim_r, regs_r = model.forward_ref(x, similar)
    assert score.shape == score_r.shape and sim_score.shape == sim_r.shape
    assert jnp.allclose(score, score_r, rtol=1e-5, atol=1e-6)
    assert jnp.allclose(sim_score, sim_r, rtol=1e-5, atol=1e-6)
    for a, b in zip(regs, regs_r):
        assert jnp.allclose(a, b, rtol=1e-5, atol=1e-6)

    print("KERNEL_OK")
</pallas_src>

<mosaic_0001>
module attributes {stable_mosaic.version = 11 : i64} {
  func.func @_loc_score_kernel(%arg0: i32, %arg1: memref<8x64xf32, #tpu.memory_space<vmem>>, %arg2: memref<8x64xf32, #tpu.memory_space<vmem>>, %arg3: memref<8x64xf32, #tpu.memory_space<vmem>>, %arg4: memref<128x64xf32, #tpu.memory_space<vmem>>, %arg5: memref<8x128xf32, #tpu.memory_space<vmem>>, %arg6: memref<8x32xf32, #tpu.memory_space<vmem>>, %arg7: memref<8x32xf32, #tpu.memory_space<vmem>>, %arg8: memref<8x32xf32, #tpu.memory_space<vmem>>) attributes {dimension_semantics = [#tpu.dimension_semantics<parallel>], iteration_bounds = array<i64: 2>, scalar_prefetch = 0 : i64, scratch_operands = 0 : i64, tpu.core_type = #tpu.core_type<tc>, window_params = [{pipeline_mode = #tpu.pipeline_mode<synchronous>, transform_indices = @transform_0, window_bounds = array<i64: 8, 64>}, {pipeline_mode = #tpu.pipeline_mode<synchronous>, transform_indices = @transform_1, window_bounds = array<i64: 8, 64>}, {pipeline_mode = #tpu.pipeline_mode<synchronous>, transform_indices = @transform_2, window_bounds = array<i64: 8, 64>}, {transform_indices = @transform_3, window_bounds = array<i64: 128, 64>}, {transform_indices = @transform_4, window_bounds = array<i64: 8, 128>}, {pipeline_mode = #tpu.pipeline_mode<synchronous>, transform_indices = @transform_5, window_bounds = array<i64: 8, 32>}, {pipeline_mode = #tpu.pipeline_mode<synchronous>, transform_indices = @transform_6, window_bounds = array<i64: 8, 32>}, {pipeline_mode = #tpu.pipeline_mode<synchronous>, transform_indices = @transform_7, window_bounds = array<i64: 8, 32>}]} {
    %c0 = arith.constant 0 : index
    %c0_0 = arith.constant 0 : index
    %0 = vector.load %arg1[%c0, %c0_0] : memref<8x64xf32, #tpu.memory_space<vmem>>, vector<8x64xf32>
    %c0_1 = arith.constant 0 : index
    %c0_2 = arith.constant 0 : index
    %1 = vector.load %arg2[%c0_1, %c0_2] : memref<8x64xf32, #tpu.memory_space<vmem>>, vector<8x64xf32>
    %2 = vector.extract_strided_slice %0 {offsets = [0, 0], sizes = [8, 32], strides = [1, 1]} : vector<8x64xf32> to vector<8x32xf32>
    %3 = vector.extract_strided_slice %0 {offsets = [0, 32], sizes = [8, 32], strides = [1, 1]} : vector<8x64xf32> to vector<8x32xf32>
    %4 = vector.extract_strided_slice %1 {offsets = [0, 0], sizes = [8, 32], strides = [1, 1]} : vector<8x64xf32> to vector<8x32xf32>
    %5 = vector.extract_strided_slice %1 {offsets = [0, 32], sizes = [8, 32], strides = [1, 1]} : vector<8x64xf32> to vector<8x32xf32>
    %6 = arith.mulf %2, %4 : vector<8x32xf32>
    %7 = arith.mulf %3, %5 : vector<8x32xf32>
    %8 = arith.subf %6, %7 : vector<8x32xf32>
    %9 = arith.mulf %3, %4 : vector<8x32xf32>
    %10 = arith.mulf %2, %5 : vector<8x32xf32>
    %11 = arith.addf %9, %10 : vector<8x32xf32>
    %12 = tpu.concatenate %8, %11 in 1 : vector<8x32xf32>, vector<8x32xf32> -> vector<8x64xf32>
    %c0_3 = arith.constant 0 : index
    %c0_4 = arith.constant 0 : index
    %13 = vector.load %arg4[%c0_3, %c0_4] : memref<128x64xf32, #tpu.memory_space<vmem>>, vector<128x64xf32>
    %cst = arith.constant dense<0.000000e+00> : vector<8x128xf32>
    %14 = tpu.matmul %12, %13, %cst {dimension_numbers = #tpu.dot_dimension_numbers<[1], [1], [0], [0], [0, 0, 1, 0], [], []>} : vector<8x64xf32>, vector<128x64xf32>, vector<8x128xf32> -> vector<8x128xf32>
    %c0_5 = arith.constant 0 : index
    %c0_6 = arith.constant 0 : index
    %15 = vector.load %arg5[%c0_5, %c0_6] : memref<8x128xf32, #tpu.memory_space<vmem>>, vector<8x128xf32>
    tpu.vector_store %arg5[%c0_5, %c0_6], %14 {strides = array<i32>} : memref<8x128xf32, #tpu.memory_space<vmem>>, vector<8x128xf32>,
    %c0_7 = arith.constant 0 : index
    %c0_8 = arith.constant 0 : index
    %16 = vector.load %arg3[%c0_7, %c0_8] : memref<8x64xf32, #tpu.memory_space<vmem>>, vector<8x64xf32>
    %17 = vector.extract_strided_slice %0 {offsets = [0, 0], sizes = [8, 32], strides = [1, 1]} : vector<8x64xf32> to vector<8x32xf32>
    %18 = arith.mulf %17, %17 : vector<8x32xf32>
    %19 = vector.extract_strided_slice %0 {offsets = [0, 32], sizes = [8, 32], strides = [1, 1]} : vector<8x64xf32> to vector<8x32xf32>
    %20 = arith.mulf %19, %19 : vector<8x32xf32>
    %21 = arith.addf %18, %20 : vector<8x32xf32>
    %22 = math.sqrt %21 : vector<8x32xf32>
    %c0_9 = arith.constant 0 : index
    %c0_10 = arith.constant 0 : index
    %23 = vector.load %arg6[%c0_9, %c0_10] : memref<8x32xf32, #tpu.memory_space<vmem>>, vector<8x32xf32>
    tpu.vector_store %arg6[%c0_9, %c0_10], %22 {strides = array<i32>} : memref<8x32xf32, #tpu.memory_space<vmem>>, vector<8x32xf32>,
    %24 = vector.extract_strided_slice %1 {offsets = [0, 0], sizes = [8, 32], strides = [1, 1]} : vector<8x64xf32> to vector<8x32xf32>
    %25 = arith.mulf %24, %24 : vector<8x32xf32>
    %26 = vector.extract_strided_slice %1 {offsets = [0, 32], sizes = [8, 32], strides = [1, 1]} : vector<8x64xf32> to vector<8x32xf32>
    %27 = arith.mulf %26, %26 : vector<8x32xf32>
    %28 = arith.addf %25, %27 : vector<8x32xf32>
    %29 = math.sqrt %28 : vector<8x32xf32>
    %c0_11 = arith.constant 0 : index
    %c0_12 = arith.constant 0 : index
    %30 = vector.load %arg7[%c0_11, %c0_12] : memref<8x32xf32, #tpu.memory_space<vmem>>, vector<8x32xf32>
    tpu.vector_store %arg7[%c0_11, %c0_12], %29 {strides = array<i32>} : memref<8x32xf32, #tpu.memory_space<vmem>>, vector<8x32xf32>,
    %31 = vector.extract_strided_slice %16 {offsets = [0, 0], sizes = [8, 32], strides = [1, 1]} : vector<8x64xf32> to vector<8x32xf32>
    %32 = arith.mulf %31, %31 : vector<8x32xf32>
    %33 = vector.extract_strided_slice %16 {offsets = [0, 32], sizes = [8, 32], strides = [1, 1]} : vector<8x64xf32> to vector<8x32xf32>
    %34 = arith.mulf %33, %33 : vector<8x32xf32>
    %35 = arith.addf %32, %34 : vector<8x32xf32>
    %36 = math.sqrt %35 : vector<8x32xf32>
    %c0_13 = arith.constant 0 : index
    %c0_14 = arith.constant 0 : index
    %37 = vector.load %arg8[%c0_13, %c0_14] : memref<8x32xf32, #tpu.memory_space<vmem>>, vector<8x32xf32>
    tpu.vector_store %arg8[%c0_13, %c0_14], %36 {strides = array<i32>} : memref<8x32xf32, #tpu.memory_space<vmem>>, vector<8x32xf32>,
    return
  }
  func.func @transform_0(%arg0: i32) -> (i32, i32) {
    %c0_i32 = arith.constant 0 : i32
    %c0_i32_0 = arith.constant 0 : i32
    %c0_i32_1 = arith.constant 0 : i32
    return %c0_i32, %c0_i32_0 : i32, i32
  }
  func.func @transform_1(%arg0: i32) -> (i32, i32) {
    %c0_i32 = arith.constant 0 : i32
    %c0_i32_0 = arith.constant 0 : i32
    %c0_i32_1 = arith.constant 0 : i32
    return %c0_i32, %c0_i32_0 : i32, i32
  }
  func.func @transform_2(%arg0: i32) -> (i32, i32) {
    %c0_i32 = arith.constant 0 : i32
    %c0_i32_0 = arith.constant 0 : i32
    %c0_i32_1 = arith.constant 0 : i32
    return %c0_i32, %c0_i32_0 : i32, i32
  }
  func.func @transform_3(%arg0: i32) -> (i32, i32) {
    %c0_i32 = arith.constant 0 : i32
    %c0_i32_0 = arith.constant 0 : i32
    return %arg0, %c0_i32 : i32, i32
  }
  func.func @transform_4(%arg0: i32) -> (i32, i32) {
    %c0_i32 = arith.constant 0 : i32
    %c0_i32_0 = arith.constant 0 : i32
    return %c0_i32, %arg0 : i32, i32
  }
  func.func @transform_5(%arg0: i32) -> (i32, i32) {
    %c0_i32 = arith.constant 0 : i32
    %c0_i32_0 = arith.constant 0 : i32
    %c0_i32_1 = arith.constant 0 : i32
    return %c0_i32, %c0_i32_0 : i32, i32
  }
  func.func @transform_6(%arg0: i32) -> (i32, i32) {
    %c0_i32 = arith.constant 0 : i32
    %c0_i32_0 = arith.constant 0 : i32
    %c0_i32_1 = arith.constant 0 : i32
    return %c0_i32, %c0_i32_0 : i32, i32
  }
  func.func @transform_7(%arg0: i32) -> (i32, i32) {
    %c0_i32 = arith.constant 0 : i32
    %c0_i32_0 = arith.constant 0 : i32
    %c0_i32_1 = arith.constant 0 : i32
    return %c0_i32, %c0_i32_0 : i32, i32
  }
}

module attributes {stable_mosaic.version = 11 : i64} {
  func.func @_sim_score_kernel(%arg0: i32, %arg1: memref<8x64xf32, #tpu.memory_space<vmem>>, %arg2: memref<8x64xf32, #tpu.memory_space<vmem>>, %arg3: memref<128x64xf32, #tpu.memory_space<vmem>>, %arg4: memref<8x128xf32, #tpu.memory_space<vmem>>) attributes {dimension_semantics = [#tpu.dimension_semantics<parallel>], iteration_bounds = array<i64: 1>, scalar_prefetch = 0 : i64, scratch_operands = 0 : i64, tpu.core_type = #tpu.core_type<tc>, window_params = [{pipeline_mode = #tpu.pipeline_mode<synchronous>, transform_indices = @transform_0, window_bounds = array<i64: 8, 64>}, {pipeline_mode = #tpu.pipeline_mode<synchronous>, transform_indices = @transform_1, window_bounds = array<i64: 8, 64>}, {transform_indices = @transform_2, window_bounds = array<i64: 128, 64>}, {transform_indices = @transform_3, window_bounds = array<i64: 8, 128>}]} {
    %c0 = arith.constant 0 : index
    %c0_0 = arith.constant 0 : index
    %0 = vector.load %arg1[%c0, %c0_0] : memref<8x64xf32, #tpu.memory_space<vmem>>, vector<8x64xf32>
    %c0_1 = arith.constant 0 : index
    %c0_2 = arith.constant 0 : index
    %1 = vector.load %arg2[%c0_1, %c0_2] : memref<8x64xf32, #tpu.memory_space<vmem>>, vector<8x64xf32>
    %2 = vector.extract_strided_slice %0 {offsets = [0, 0], sizes = [8, 32], strides = [1, 1]} : vector<8x64xf32> to vector<8x32xf32>
    %3 = vector.extract_strided_slice %0 {offsets = [0, 32], sizes = [8, 32], strides = [1, 1]} : vector<8x64xf32> to vector<8x32xf32>
    %4 = vector.extract_strided_slice %1 {offsets = [0, 0], sizes = [8, 32], strides = [1, 1]} : vector<8x64xf32> to vector<8x32xf32>
    %5 = vector.extract_strided_slice %1 {offsets = [0, 32], sizes = [8, 32], strides = [1, 1]} : vector<8x64xf32> to vector<8x32xf32>
    %6 = arith.mulf %2, %4 : vector<8x32xf32>
    %7 = arith.mulf %3, %5 : vector<8x32xf32>
    %8 = arith.subf %6, %7 : vector<8x32xf32>
    %9 = arith.mulf %3, %4 : vector<8x32xf32>
    %10 = arith.mulf %2, %5 : vector<8x32xf32>
    %11 = arith.addf %9, %10 : vector<8x32xf32>
    %12 = tpu.concatenate %8, %11 in 1 : vector<8x32xf32>, vector<8x32xf32> -> vector<8x64xf32>
    %c0_3 = arith.constant 0 : index
    %c0_4 = arith.constant 0 : index
    %13 = vector.load %arg3[%c0_3, %c0_4] : memref<128x64xf32, #tpu.memory_space<vmem>>, vector<128x64xf32>
    %cst = arith.constant dense<0.000000e+00> : vector<8x128xf32>
    %14 = tpu.matmul %12, %13, %cst {dimension_numbers = #tpu.dot_dimension_numbers<[1], [1], [0], [0], [0, 0, 1, 0], [], []>} : vector<8x64xf32>, vector<128x64xf32>, vector<8x128xf32> -> vector<8x128xf32>
    %c0_5 = arith.constant 0 : index
    %c0_6 = arith.constant 0 : index
    %15 = vector.load %arg4[%c0_5, %c0_6] : memref<8x128xf32, #tpu.memory_space<vmem>>, vector<8x128xf32>
    tpu.vector_store %arg4[%c0_5, %c0_6], %14 {strides = array<i32>} : memref<8x128xf32, #tpu.memory_space<vmem>>, vector<8x128xf32>,
    return
  }
  func.func @transform_0(%arg0: i32) -> (i32, i32) {
    %c0_i32 = arith.constant 0 : i32
    %c0_i32_0 = arith.constant 0 : i32
    %c0_i32_1 = arith.constant 0 : i32
    return %c0_i32, %c0_i32_0 : i32, i32
  }
  func.func @transform_1(%arg0: i32) -> (i32, i32) {
    %c0_i32 = arith.constant 0 : i32
    %c0_i32_0 = arith.constant 0 : i32
    %c0_i32_1 = arith.constant 0 : i32
    return %c0_i32, %c0_i32_0 : i32, i32
  }
  func.func @transform_2(%arg0: i32) -> (i32, i32) {
    %c0_i32 = arith.constant 0 : i32
    %c0_i32_0 = arith.constant 0 : i32
    return %arg0, %c0_i32 : i32, i32
  }
  func.func @transform_3(%arg0: i32) -> (i32, i32) {
    %c0_i32 = arith.constant 0 : i32
    %c0_i32_0 = arith.constant 0 : i32
    return %c0_i32, %arg0 : i32, i32
  }
}

</mosaic_0001>

<llo_original>
// kernel: _rcomplex_forward.2
$region0: #{_rcomplex_forward.2}
  #allocation0 [shape = 'u32[]', space=smem, size = 0x4, offset = 0x4, fixed_abs, tag = 'smem constant byte address 0x4 - core index']
  #allocation1 [shape = 'u32[144,128]{1,0:T(1,128)}', space=vmem, size = 0x12000, scoped, tag = 'internal scratch']
  %s0 = inlined_call_operand.vmem [shape: f32[8,64], index: 0, kind: input, shape index: {}]
  %s1 = inlined_call_operand.vmem [shape: f32[8,64], index: 1, kind: input, shape index: {}]
  %s2 = inlined_call_operand.vmem [shape: f32[8,64], index: 2, kind: input, shape index: {}]
  %s3 = inlined_call_operand.vmem [shape: f32[256,64], index: 3, kind: input, shape index: {}]
  %s4 = inlined_call_operand.hbm [shape: f32[8,256], index: 4, kind: output, shape index: {0}]
  %s5 = inlined_call_operand.hbm [shape: f32[8,32], index: 5, kind: output, shape index: {1}]
  %s6 = inlined_call_operand.hbm [shape: f32[8,32], index: 6, kind: output, shape index: {2}]
  %s7 = inlined_call_operand.hbm [shape: f32[8,32], index: 7, kind: output, shape index: {3}]
  %8 = xla_tuple %s4, %s5, %s6, %s7
  %s9 = sld [smem:[#allocation0]]
  $region73: #{_rcomplex_forward.2} parent=0
    _
  %s11 = ssub.s32 1, %s9
  %s12 = scalar_select 0, %s11, %s9
  $region1: #{_rcomplex_forward.2} parent=0
    #allocation2 [shape = 'u8[8192]{0}', space=vmem, size = 0x2000, scoped, tag = 'output window, operand 0']
    #allocation3 [shape = 's32[2]{0}', space=sflag, size = 0x8, scoped, tag = 'scoped memory for _rcomplex_forward.2']
    #allocation4 [shape = 'u8[4096]{0}', space=vmem, size = 0x1000, scoped, tag = 'output window, operand 1, single buffered']
    #allocation5 [shape = 's32[1]{0}', space=sflag, size = 0x4, scoped, tag = 'scoped memory for _rcomplex_forward.2']
    #allocation6 [shape = 'u8[4096]{0}', space=vmem, size = 0x1000, scoped, tag = 'output window, operand 2, single buffered']
    #allocation7 [shape = 'u8[4096]{0}', space=vmem, size = 0x1000, scoped, tag = 'output window, operand 3, single buffered']
    #allocation8 [shape = 's32[1]{0}', space=sflag, size = 0x4, scoped, tag = 'scoped memory for _rcomplex_forward.2']
    %13 = vsyncpa [#allocation3], 0
    %s14 = scalar_lea.sflag [#allocation3], 1
    %15 = vsyncpa %s14, 0
    %16 = vsyncpa [#allocation5], 0
    %17 = vsyncpa [#allocation8], 0
    loop: start=0, step=1, limit=4
    $region2: #{_rcomplex_forward.2} parent=1 // loop_pre_header
      _
    $region3: #{_rcomplex_forward.2} parent=1 // loop_header
      %s19 = sphi 0, %s23
      %p20 = scmp.ge.s32.totalorder %s19, 4
      %s27 = sphi 0, %s27
      %s29 = sphi 0, %s27
      %s30 = sphi 0, %s29
      %s44 = sphi 0, %s30
      %s48 = sphi 0, %s48
      %s50 = sphi 0, %s48
      %s51 = sphi 0, %s50
      %s65 = sphi 0, %s51
      %s69 = sphi 0, %s69
      %s71 = sphi 0, %s69
      %s72 = sphi 0, %s71
      %s86 = sphi 0, %s72
      %s92 = sphi 0, %s94
      %s95 = sphi 0, %s92
      %s96 = sphi 0, %s95
      %s112 = sphi 0, %s96
      %s118 = sphi 0, %s120
      %s121 = sphi 0, %s118
      %s122 = sphi 0, %s121
      %s138 = sphi 0, %s122
      %s142 = sphi 0, %s142
      %s144 = sphi 0, %s142
      %s145 = sphi 0, %s144
      %s159 = sphi 0, %s145
      %s163 = sphi 0, %s163
      %s165 = sphi 0, %s163
      %s166 = sphi 0, %s165
      %s180 = sphi 0, %s166
      %s184 = sphi 0, %s184
      %s186 = sphi 0, %s184
      %s187 = sphi 0, %s186
      %s201 = sphi 0, %s187
    $region4: #{_rcomplex_forward.2} parent=1 // loop_header_branch
      %22 = sbr.rel (%p20) target = $region8
    $region5: #{_rcomplex_forward.2} parent=1 // loop_body
      %s24 = ssub.s32 %s19, 1
      %s25 = ssub.s32 %s19, 2
      %s26 = sadd.s32 %s19, 1
      %s28 = sadd.s32 %s27, 1
      %p31 = scmp.eq.s32.totalorder %s19, 1
      %p32 = scmp.ne.s32.totalorder %s27, %s29
      %p33 = scmp.eq.s32.totalorder %s19, 0
      %p34 = por %p32, %p33
      %p35 = scmp.ne.s32.totalorder %s27, %s29
      %p36 = scmp.eq.s32.totalorder %s24, 1
      %p37 = por %p35, %p36
      %p38 = scmp.ne.s32.totalorder %s29, %s30
      %p39 = scmp.eq.s32.totalorder %s24, 0
      %p40 = por %p38, %p39
      %p41 = scmp.ne.s32.totalorder %s29, %s30
      %p42 = scmp.eq.s32.totalorder %s25, 1
      %p43 = por %p41, %p42
      %p45 = scmp.ne.s32.totalorder %s30, %s44
      %p46 = scmp.eq.s32.totalorder %s25, 0
      %p47 = por %p45, %p46
      %s49 = sadd.s32 %s48, 1
      %p52 = scmp.eq.s32.totalorder %s19, 1
      %p53 = scmp.ne.s32.totalorder %s48, %s50
      %p54 = scmp.eq.s32.totalorder %s19, 0
      %p55 = por %p53, %p54
      %p56 = scmp.ne.s32.totalorder %s48, %s50
      %p57 = scmp.eq.s32.totalorder %s24, 1
      %p58 = por %p56, %p57
      %p59 = scmp.ne.s32.totalorder %s50, %s51
      %p60 = scmp.eq.s32.totalorder %s24, 0
      %p61 = por %p59, %p60
      %p62 = scmp.ne.s32.totalorder %s50, %s51
      %p63 = scmp.eq.s32.totalorder %s25, 1
      %p64 = por %p62, %p63
      %p66 = scmp.ne.s32.totalorder %s51, %s65
      %p67 = scmp.eq.s32.totalorder %s25, 0
      %p68 = por %p66, %p67
      %s70 = sadd.s32 %s69, 1
      %p73 = scmp.eq.s32.totalorder %s19, 1
      %p74 = scmp.ne.s32.totalorder %s69, %s71
      %p75 = scmp.eq.s32.totalorder %s19, 0
      %p76 = por %p74, %p75
      %p77 = scmp.ne.s32.totalorder %s69, %s71
      %p78 = scmp.eq.s32.totalorder %s24, 1
      %p79 = por %p77, %p78
      %p80 = scmp.ne.s32.totalorder %s71, %s72
      %p81 = scmp.eq.s32.totalorder %s24, 0
      %p82 = por %p80, %p81
      %p83 = scmp.ne.s32.totalorder %s71, %s72
      %p84 = scmp.eq.s32.totalorder %s25, 1
      %p85 = por %p83, %p84
      %p87 = scmp.ne.s32.totalorder %s72, %s86
      %p88 = scmp.eq.s32.totalorder %s25, 0
      %p89 = por %p87, %p88
      %s90 = ssub.s32 %s19, %s26
      %p91 = scmp.eq.s32.totalorder %s90, 0
      %s93 = sadd.s32 %s92, 1
      %s94 = scalar_select %p91, %s92, %s93
      %p97 = pneg %p91
      %p98 = scmp.eq.s32.totalorder %s19, 1
      %p99 = por %p97, %p98
      %p100 = scmp.ne.s32.totalorder %s92, %s95
      %p101 = scmp.eq.s32.totalorder %s19, 0
      %p102 = por %p100, %p101
      %p103 = scmp.ne.s32.totalorder %s92, %s95
      %p104 = scmp.eq.s32.totalorder %s24, 1
      %p105 = por %p103, %p104
      %p106 = scmp.ne.s32.totalorder %s95, %s96
      %p107 = scmp.eq.s32.totalorder %s24, 0
      %p108 = por %p106, %p107
      %p109 = scmp.ne.s32.totalorder %s95, %s96
      %p110 = scmp.eq.s32.totalorder %s25, 1
      %p111 = por %p109, %p110
      %p113 = scmp.ne.s32.totalorder %s96, %s112
      %p114 = scmp.eq.s32.totalorder %s25, 0
      %p115 = por %p113, %p114
      %s116 = ssub.s32 %s19, %s26
      %p117 = scmp.eq.s32.totalorder %s116, 0
      %s119 = sadd.s32 %s118, 1
      %s120 = scalar_select %p117, %s118, %s119
      %p123 = pneg %p117
      %p124 = scmp.eq.s32.totalorder %s19, 1
      %p125 = por %p123, %p124
      %p126 = scmp.ne.s32.totalorder %s118, %s121
      %p127 = scmp.eq.s32.totalorder %s19, 0
      %p128 = por %p126, %p127
      %p129 = scmp.ne.s32.totalorder %s118, %s121
      %p130 = scmp.eq.s32.totalorder %s24, 1
      %p131 = por %p129, %p130
      %p132 = scmp.ne.s32.totalorder %s121, %s122
      %p133 = scmp.eq.s32.totalorder %s24, 0
      %p134 = por %p132, %p133
      %p135 = scmp.ne.s32.totalorder %s121, %s122
      %p136 = scmp.eq.s32.totalorder %s25, 1
      %p137 = por %p135, %p136
      %p139 = scmp.ne.s32.totalorder %s122, %s138
      %p140 = scmp.eq.s32.totalorder %s25, 0
      %p141 = por %p139, %p140
      %s143 = sadd.s32 %s142, 1
      %p146 = scmp.eq.s32.totalorder %s19, 1
      %p147 = scmp.ne.s32.totalorder %s142, %s144
      %p148 = scmp.eq.s32.totalorder %s19, 0
      %p149 = por %p147, %p148
      %p150 = scmp.ne.s32.totalorder %s142, %s144
      %p151 = scmp.eq.s32.totalorder %s24, 1
      %p152 = por %p150, %p151
      %p153 = scmp.ne.s32.totalorder %s144, %s145
      %p154 = scmp.eq.s32.totalorder %s24, 0
      %p155 = por %p153, %p154
      %p156 = scmp.ne.s32.totalorder %s144, %s145
      %p157 = scmp.eq.s32.totalorder %s25, 1
      %p158 = por %p156, %p157
      %p160 = scmp.ne.s32.totalorder %s145, %s159
      %p161 = scmp.eq.s32.totalorder %s25, 0
      %p162 = por %p160, %p161
      %s164 = sadd.s32 %s163, 1
      %p167 = scmp.eq.s32.totalorder %s19, 1
      %p168 = scmp.ne.s32.totalorder %s163, %s165
      %p169 = scmp.eq.s32.totalorder %s19, 0
      %p170 = por %p168, %p169
      %p171 = scmp.ne.s32.totalorder %s163, %s165
      %p172 = scmp.eq.s32.totalorder %s24, 1
      %p173 = por %p171, %p172
      %p174 = scmp.ne.s32.totalorder %s165, %s166
      %p175 = scmp.eq.s32.totalorder %s24, 0
      %p176 = por %p174, %p175
      %p177 = scmp.ne.s32.totalorder %s165, %s166
      %p178 = scmp.eq.s32.totalorder %s25, 1
      %p179 = por %p177, %p178
      %p181 = scmp.ne.s32.totalorder %s166, %s180
      %p182 = scmp.eq.s32.totalorder %s25, 0
      %p183 = por %p181, %p182
      %s185 = sadd.s32 %s184, 1
      %p188 = scmp.eq.s32.totalorder %s19, 1
      %p189 = scmp.ne.s32.totalorder %s184, %s186
      %p190 = scmp.eq.s32.totalorder %s19, 0
      %p191 = por %p189, %p190
      %p192 = scmp.ne.s32.totalorder %s184, %s186
      %p193 = scmp.eq.s32.totalorder %s24, 1
      %p194 = por %p192, %p193
      %p195 = scmp.ne.s32.totalorder %s186, %s187
      %p196 = scmp.eq.s32.totalorder %s24, 0
      %p197 = por %p195, %p196
      %p198 = scmp.ne.s32.totalorder %s186, %s187
      %p199 = scmp.eq.s32.totalorder %s25, 1
      %p200 = por %p198, %p199
      %p202 = scmp.ne.s32.totalorder %s187, %s201
      %p203 = scmp.eq.s32.totalorder %s25, 0
      %p204 = por %p202, %p203
      %p205 = scmp.le.s32.totalorder 1, %s19
      %p206 = scmp.lt.s32.totalorder %s19, 3
      %p207 = pnand %p205, %p206
      %p208 = pneg %p207
      // Predicated region
      $region9: #{_rcomplex_forward.2} parent=5 // pred_check
        _
      $region10: #{_rcomplex_forward.2} parent=5 // pred_check_branch
        %210 = sbr.rel (%p207) target = $region12
      $region11: #{_rcomplex_forward.2} parent=5 // pred_region
        %s211 = ssub.s32 %s19, 1
        // Predicated region
        $region13: #{_rcomplex_forward.2} parent=11 // pred_check
          %p212 = pneg %p40
        $region14: #{_rcomplex_forward.2} parent=11 // pred_check_branch
          %214 = sbr.rel (%p212) target = $region16
        $region15: #{_rcomplex_forward.2} parent=11 // pred_region
          _
        $region16: #{_rcomplex_forward.2} parent=11 // pred_fallthru
          _
        // Predicated region
        $region17: #{_rcomplex_forward.2} parent=11 // pred_check
          %p215 = pneg %p61
        $region18: #{_rcomplex_forward.2} parent=11 // pred_check_branch
          %217 = sbr.rel (%p215) target = $region20
        $region19: #{_rcomplex_forward.2} parent=11 // pred_region
          _
        $region20: #{_rcomplex_forward.2} parent=11 // pred_fallthru
          _
        // Predicated region
        $region21: #{_rcomplex_forward.2} parent=11 // pred_check
          %p218 = pneg %p82
        $region22: #{_rcomplex_forward.2} parent=11 // pred_check_branch
          %220 = sbr.rel (%p218) target = $region24
        $region23: #{_rcomplex_forward.2} parent=11 // pred_region
          _
        $region24: #{_rcomplex_forward.2} parent=11 // pred_fallthru
          _
      $region12: #{_rcomplex_forward.2} parent=5 // pred_fallthru
        _
      %p221 = scmp.lt.s32.totalorder %s19, 2
      // Predicated region
      $region25: #{_rcomplex_forward.2} parent=5 // pred_check
        %p222 = pneg %p221
      $region26: #{_rcomplex_forward.2} parent=5 // pred_check_branch
        %224 = sbr.rel (%p222) target = $region28
      $region27: #{_rcomplex_forward.2} parent=5 // pred_region
        // Predicated region
        $region29: #{_rcomplex_forward.2} parent=27 // pred_check
          %p225 = pneg %p102
        $region30: #{_rcomplex_forward.2} parent=27 // pred_check_branch
          %227 = sbr.rel (%p225) target = $region32
        $region31: #{_rcomplex_forward.2} parent=27 // pred_region
          %s228 = smul.u32 16, %s19
          %p229 = scmp.lt.s32.totalorder %s228, 31
          %s230 = scalar_select %p229, %s228, 31
          %s231 = smul.addr %s230, 8
          %s232 = scalar_lea.vmem %s3, %s231
          %s233 = smul.u32 16, %s19
        $region32: #{_rcomplex_forward.2} parent=27 // pred_fallthru
          _
      $region28: #{_rcomplex_forward.2} parent=5 // pred_fallthru
        _
      %p234 = scmp.le.s32.totalorder 1, %s19
      %p235 = scmp.lt.s32.totalorder %s19, 3
      %p236 = pnand %p234, %p235
      %p237 = pneg %p236
      // Predicated region
      $region33: #{_rcomplex_forward.2} parent=5 // pred_check
        _
      $region34: #{_rcomplex_forward.2} parent=5 // pred_check_branch
        %239 = sbr.rel (%p236) target = $region36
      $region35: #{_rcomplex_forward.2} parent=5 // pred_region
        %s240 = ssub.s32 %s19, 1
        %p241 = pneg %p40
        %p242 = pneg %p37
        %p243 = pneg %p61
        %p244 = pneg %p58
        %p245 = pneg %p82
        %p246 = pneg %p79
        %s247 = smul.u32 16, %s24
        %p248 = scmp.lt.s32.totalorder %s247, 31
        %s249 = scalar_select %p248, %s247, 31
        %s250 = smul.addr %s249, 8
        %s251 = scalar_lea.vmem %s3, %s250
        %p252 = pneg %p108
        %p253 = pneg %p105
        %p254 = pneg %p134
        %p255 = pneg %p131
        %s256 = sand.u32 %s121, 1
        %s257 = scalar_lea.sflag [#allocation3], %s256
        %s258 = sand.u32 %s121, 1
        %s259 = smul.addr %s258, 8
        %s260 = scalar_lea.vmem [#allocation2], %s259
        %p261 = pneg %p155
        %p262 = pneg %p152
        %p263 = pneg %p176
        %p264 = pneg %p173
        %p265 = pneg %p197
        %p266 = pneg %p194
        %s267 = smul.u32 16, %s24
        %p268 = scmp.lt.s32.totalorder %s267, 31
        %s269 = scalar_select %p268, %s267, 31
        %s270 = smul.addr %s269, 8
        %s271 = scalar_lea.vmem %s3, %s270
        %s272 = smul.u32 16, %s24
        %v273 = vld [vmem:[%s0] sm:$0xff]
        %v274 = vld [vmem:[%s1] sm:$0xff]
        %v275 = vmul.f32 %v273, %v274
        %277 = vrot.lane.b32.xlu0 %v275, 96
        %v278 = vpop.permute.xlu0 %277
        %v280 = vsub.f32 %v275, %v278
        %282 = vrot.lane.b32.xlu0 %v274, 32
        %v283 = vpop.permute.xlu0 %282
        %v285 = vmul.f32 %v273, %v283
        %286 = vrot.lane.b32.xlu0 %v274, 96
        %v287 = vpop.permute.xlu0 %286
        %v289 = vmul.f32 %v273, %v287
        %291 = vrot.lane.b32.xlu0 %v289, 32
        %v292 = vpop.permute.xlu0 %291
        %v294 = vadd.f32 %v285, %v292
        %vm295 = vcmask 261120
        %v296 = vsel %vm295, %v280, %v294
        %v297 = vld [vmem:[%s271] sm:$0xff]
        %v298 = vld [vmem:[%s271 + $0x8] sm:$0xff]
        %v299 = vld [vmem:[%s271 + $0x10] sm:$0xff]
        %v300 = vld [vmem:[%s271 + $0x18] sm:$0xff]
        %v301 = vld [vmem:[%s271 + $0x20] sm:$0xff]
        %v302 = vld [vmem:[%s271 + $0x28] sm:$0xff]
        %v303 = vld [vmem:[%s271 + $0x30] sm:$0xff]
        %v304 = vld [vmem:[%s271 + $0x38] sm:$0xff]
        %v305 = vld [vmem:[%s271 + $0x40] sm:$0xff]
        %v306 = vld [vmem:[%s271 + $0x48] sm:$0xff]
        %v307 = vld [vmem:[%s271 + $0x50] sm:$0xff]
        %v308 = vld [vmem:[%s271 + $0x58] sm:$0xff]
        %v309 = vld [vmem:[%s271 + $0x60] sm:$0xff]
        %v310 = vld [vmem:[%s271 + $0x68] sm:$0xff]
        %v311 = vld [vmem:[%s271 + $0x70] sm:$0xff]
        %v312 = vld [vmem:[%s271 + $0x78] sm:$0xff]
        %vm313 = vcmask 523264
        %v315 = vsel %vm313, %v296, 0
        %v318 = vsel %vm313, %v297, 0
        %v321 = vsel %vm313, %v298, 0
        %v324 = vsel %vm313, %v299, 0
        %v327 = vsel %vm313, %v300, 0
        %v330 = vsel %vm313, %v301, 0
        %v333 = vsel %vm313, %v302, 0
        %v336 = vsel %vm313, %v303, 0
        %v339 = vsel %vm313, %v304, 0
        %v342 = vsel %vm313, %v305, 0
        %v345 = vsel %vm313, %v306, 0
        %v348 = vsel %vm313, %v307, 0
        %v351 = vsel %vm313, %v308, 0
        %v354 = vsel %vm313, %v309, 0
        %v357 = vsel %vm313, %v310, 0
        %v360 = vsel %vm313, %v311, 0
        %v363 = vsel %vm313, %v312, 0
        %365 = vmatprep.subr.mxu0 0.0
        %366 = vmatpush1.xpose.msra.mxu0 %v318
        %367 = vmatprep.subr.mxu0 0.0
        %368 = vmatpush1.xpose.msra.mxu0 %v321
        %369 = vmatprep.subr.mxu0 0.0
        %370 = vmatpush1.xpose.msra.mxu0 %v324
        %371 = vmatprep.subr.mxu0 0.0
        %372 = vmatpush1.xpose.msra.mxu0 %v327
        %373 = vmatprep.subr.mxu0 0.0
        %374 = vmatpush1.xpose.msra.mxu0 %v330
        %375 = vmatprep.subr.mxu0 0.0
        %376 = vmatpush1.xpose.msra.mxu0 %v333
        %377 = vmatprep.subr.mxu0 0.0
        %378 = vmatpush1.xpose.msra.mxu0 %v336
        %379 = vmatprep.subr.mxu0 0.0
        %380 = vmatpush1.xpose.msra.mxu0 %v339
        %381 = vmatprep.subr.mxu0 0.0
        %382 = vmatpush1.xpose.msra.mxu0 %v342
        %383 = vmatprep.subr.mxu0 0.0
        %384 = vmatpush1.xpose.msra.mxu0 %v345
        %385 = vmatprep.subr.mxu0 0.0
        %386 = vmatpush1.xpose.msra.mxu0 %v348
        %387 = vmatprep.subr.mxu0 0.0
        %388 = vmatpush1.xpose.msra.mxu0 %v351
        %389 = vmatprep.subr.mxu0 0.0
        %390 = vmatpush1.xpose.msra.mxu0 %v354
        %391 = vmatprep.subr.mxu0 0.0
        %392 = vmatpush1.xpose.msra.mxu0 %v357
        %393 = vmatprep.subr.mxu0 0.0
        %394 = vmatpush1.xpose.msra.mxu0 %v360
        %395 = vmatprep.subr.mxu0 0.0
        %396 = vmatpush1.xpose.msra.mxu0 %v363
        %397 = vmatprep.subr.mxu0 0.0
        %398 = vmatpush1.xpose.msra.mxu0 0.0
        %399 = vmatprep.subr.mxu0 0.0
        %400 = vmatpush1.xpose.msra.mxu0 0.0
        %401 = vmatprep.subr.mxu0 0.0
        %402 = vmatpush1.xpose.msra.mxu0 0.0
        %403 = vmatprep.subr.mxu0 0.0
        %404 = vmatpush1.xpose.msra.mxu0 0.0
        %405 = vmatprep.subr.mxu0 0.0
        %406 = vmatpush1.xpose.msra.mxu0 0.0
        %407 = vmatprep.subr.mxu0 0.0
        %408 = vmatpush1.xpose.msra.mxu0 0.0
        %409 = vmatprep.subr.mxu0 0.0
        %410 = vmatpush1.xpose.msra.mxu0 0.0
        %411 = vmatprep.subr.mxu0 0.0
        %412 = vmatpush1.xpose.msra.mxu0 0.0
        %413 = vmatprep.subr.mxu0 0.0
        %414 = vmatpush1.xpose.msra.mxu0 0.0
        %415 = vmatprep.subr.mxu0 0.0
        %416 = vmatpush1.xpose.msra.mxu0 0.0
        %417 = vmatprep.subr.mxu0 0.0
        %418 = vmatpush1.xpose.msra.mxu0 0.0
        %419 = vmatprep.subr.mxu0 0.0
        %420 = vmatpush1.xpose.msra.mxu0 0.0
        %421 = vmatprep.subr.mxu0 0.0
        %422 = vmatpush1.xpose.msra.mxu0 0.0
        %423 = vmatprep.subr.mxu0 0.0
        %424 = vmatpush1.xpose.msra.mxu0 0.0
        %425 = vmatprep.subr.mxu0 0.0
        %426 = vmatpush1.xpose.msra.mxu0 0.0
        %427 = vmatprep.subr.mxu0 0.0
        %428 = vmatpush1.xpose.msra.mxu0 0.0
        %429 = vmatprep.mubr.f32.mxu0 0.0
        %430 = vmatmul.mubr.f32.gmra.mrb[0].mxu0 %v315
        %v431 = vpop.f32.mrb[0].mxu0
        %v432 = vadd.f32 0.0, %v431
        %v433 = vpop.f32.mrb[0].mxu0
        %434 = vdwg.mxu0
        %435 = vst [vmem:[%s260] sm:$0xff] %v432
        %v436 = vld [vmem:[%s2] sm:$0xff]
        %v437 = vmul.f32 %v273, %v273
        %439 = vrot.lane.b32.xlu0 %v437, 96
        %v440 = vpop.permute.xlu0 %439
        %v442 = vadd.f32 %v437, %v440
        %v443 = vrsqrt.pop %v442
        %v444 = vmul.f32 %v442, %v443
        %vm445 = vcmp.eq.f32.partialorder %v442, inf
        %v446 = vsel %vm445, %v442, %v444
        %vm447 = vcmp.eq.f32.partialorder %v442, 0.0
        %v448 = vand.u32 %v442, 2147483648
        %v449 = vsel %vm447, %v448, %v446
        %450 = vst.msk [vmem:[#allocation4] sm:$0xff] %vm295, %v449
        %v451 = vmul.f32 %v274, %v274
        %453 = vrot.lane.b32.xlu0 %v451, 96
        %v454 = vpop.permute.xlu0 %453
        %v456 = vadd.f32 %v451, %v454
        %v457 = vrsqrt.pop %v456
        %v458 = vmul.f32 %v456, %v457
        %vm459 = vcmp.eq.f32.partialorder %v456, inf
        %v460 = vsel %vm459, %v456, %v458
        %vm461 = vcmp.eq.f32.partialorder %v456, 0.0
        %v462 = vand.u32 %v456, 2147483648
        %v463 = vsel %vm461, %v462, %v460
        %464 = vst.msk [vmem:[#allocation6] sm:$0xff] %vm295, %v463
        %v465 = vmul.f32 %v436, %v436
        %467 = vrot.lane.b32.xlu0 %v465, 96
        %v468 = vpop.permute.xlu0 %467
        %v470 = vadd.f32 %v465, %v468
        %v471 = vrsqrt.pop %v470
        %v472 = vmul.f32 %v470, %v471
        %vm473 = vcmp.eq.f32.partialorder %v470, inf
        %v474 = vsel %vm473, %v470, %v472
        %vm475 = vcmp.eq.f32.partialorder %v470, 0.0
        %v476 = vand.u32 %v470, 2147483648
        %v477 = vsel %vm475, %v476, %v474
        %478 = vst.msk [vmem:[#allocation7] sm:$0xff] %vm295, %v477
        %s479 = sand.u32 %s121, 1
        %s480 = scalar_lea.sflag [#allocation3], %s479
        %s481 = sand.u32 %s121, 1
        %s482 = smul.addr %s481, 8
        %s483 = scalar_lea.vmem [#allocation2], %s482
        // Predicated region
        $region37: #{_rcomplex_forward.2} parent=35 // pred_check
          %p484 = pneg %p131
        $region38: #{_rcomplex_forward.2} parent=35 // pred_check_branch
          %486 = sbr.rel (%p484) target = $region40
        $region39: #{_rcomplex_forward.2} parent=35 // pred_region
          %s488 = ssub.s32 128, 128
          %489 = vsyncadd %s480, %s488
          %s490 = smul.addr %s24, 128
          %s491 = scalar_lea.hbm %s4, %s490
          %s493 = sshll.u32 %s483, 4
          %s494 = int_to_ptr.vmem [resolvable:$true] %s493
          %496 = dma.vmem_to_hbm [thread:$0]  %s494, 128, %s491, %s480
        $region40: #{_rcomplex_forward.2} parent=35 // pred_fallthru
          _
        // Predicated region
        $region41: #{_rcomplex_forward.2} parent=35 // pred_check
          %p497 = pneg %p152
        $region42: #{_rcomplex_forward.2} parent=35 // pred_check_branch
          %499 = sbr.rel (%p497) target = $region44
        $region43: #{_rcomplex_forward.2} parent=35 // pred_region
          %s501 = ssub.s32 128, 128
          %502 = vsyncadd [#allocation5], %s501
          %s504 = sshll.u32 [#allocation4], 4
          %s505 = int_to_ptr.vmem [resolvable:$true] %s504
          %507 = dma.vmem_to_hbm [thread:$0]  %s505, 128, %s5, [#allocation5]
        $region44: #{_rcomplex_forward.2} parent=35 // pred_fallthru
          _
        // Predicated region
        $region45: #{_rcomplex_forward.2} parent=35 // pred_check
          %p508 = pneg %p173
        $region46: #{_rcomplex_forward.2} parent=35 // pred_check_branch
          %510 = sbr.rel (%p508) target = $region48
        $region47: #{_rcomplex_forward.2} parent=35 // pred_region
          %s512 = ssub.s32 128, 128
          %513 = vsyncadd [#allocation5], %s512
          %s515 = sshll.u32 [#allocation6], 4
          %s516 = int_to_ptr.vmem [resolvable:$true] %s515
          %518 = dma.vmem_to_hbm [thread:$0]  %s516, 128, %s6, [#allocation5]
        $region48: #{_rcomplex_forward.2} parent=35 // pred_fallthru
          _
        // Predicated region
        $region49: #{_rcomplex_forward.2} parent=35 // pred_check
          %p519 = pneg %p194
        $region50: #{_rcomplex_forward.2} parent=35 // pred_check_branch
          %521 = sbr.rel (%p519) target = $region52
        $region51: #{_rcomplex_forward.2} parent=35 // pred_region
          %s523 = ssub.s32 128, 128
          %524 = vsyncadd [#allocation8], %s523
          %s526 = sshll.u32 [#allocation7], 4
          %s527 = int_to_ptr.vmem [resolvable:$true] %s526
          %529 = dma.vmem_to_hbm [thread:$0]  %s527, 128, %s7, [#allocation8]
        $region52: #{_rcomplex_forward.2} parent=35 // pred_fallthru
          _
        // Predicated region
        $region53: #{_rcomplex_forward.2} parent=35 // pred_check
          %p530 = pneg %p152
        $region54: #{_rcomplex_forward.2} parent=35 // pred_check_branch
          %532 = sbr.rel (%p530) target = $region56
        $region55: #{_rcomplex_forward.2} parent=35 // pred_region
          %533 = dma.done [#allocation5], 128
        $region56: #{_rcomplex_forward.2} parent=35 // pred_fallthru
          _
        // Predicated region
        $region57: #{_rcomplex_forward.2} parent=35 // pred_check
          %p534 = pneg %p173
        $region58: #{_rcomplex_forward.2} parent=35 // pred_check_branch
          %536 = sbr.rel (%p534) target = $region60
        $region59: #{_rcomplex_forward.2} parent=35 // pred_region
          %537 = dma.done [#allocation5], 128
        $region60: #{_rcomplex_forward.2} parent=35 // pred_fallthru
          _
        // Predicated region
        $region61: #{_rcomplex_forward.2} parent=35 // pred_check
          %p538 = pneg %p194
        $region62: #{_rcomplex_forward.2} parent=35 // pred_check_branch
          %540 = sbr.rel (%p538) target = $region64
        $region63: #{_rcomplex_forward.2} parent=35 // pred_region
          %541 = dma.done [#allocation8], 128
        $region64: #{_rcomplex_forward.2} parent=35 // pred_fallthru
          _
      $region36: #{_rcomplex_forward.2} parent=5 // pred_fallthru
        _
      %p542 = scmp.le.s32.totalorder 2, %s19
      // Predicated region
      $region65: #{_rcomplex_forward.2} parent=5 // pred_check
        %p543 = pneg %p542
      $region66: #{_rcomplex_forward.2} parent=5 // pred_check_branch
        %545 = sbr.rel (%p543) target = $region68
      $region67: #{_rcomplex_forward.2} parent=5 // pred_region
        %s546 = ssub.s32 %s19, 2
        // Predicated region
        $region69: #{_rcomplex_forward.2} parent=67 // pred_check
          %p547 = pneg %p137
        $region70: #{_rcomplex_forward.2} parent=67 // pred_check_branch
          %549 = sbr.rel (%p547) target = $region72
        $region71: #{_rcomplex_forward.2} parent=67 // pred_region
          %s550 = sand.u32 %s122, 1
          %s551 = scalar_lea.sflag [#allocation3], %s550
          %s552 = sand.u32 %s122, 1
          %s553 = smul.addr %s552, 8
          %s554 = scalar_lea.vmem [#allocation2], %s553
          %555 = dma.done %s551, 128
        $region72: #{_rcomplex_forward.2} parent=67 // pred_fallthru
          _
      $region68: #{_rcomplex_forward.2} parent=5 // pred_fallthru
        _
    $region6: #{_rcomplex_forward.2} parent=1 // loop_footer
      %s23 = sadd.s32 1, %s19
    $region7: #{_rcomplex_forward.2} parent=1 // loop_footer_branch
      %18 = sbr.rel target = $region3
    $region8: #{_rcomplex_forward.2} parent=1 // loop_exit
      _
    %556 = vsyncpa [#allocation3], 1
    %s557 = scalar_lea.sflag [#allocation3], 1
    %558 = vsyncpa %s557, 1
    %559 = vsyncpa [#allocation5], 1
    %560 = vsyncpa [#allocation8], 1

// kernel: _rcomplex_forward.3
$region0: #{_rcomplex_forward.3}
  #allocation0 [shape = 'u32[]', space=smem, size = 0x4, offset = 0x4, fixed_abs, tag = 'smem constant byte address 0x4 - core index']
  #allocation1 [shape = 'u32[144,128]{1,0:T(1,128)}', space=vmem, size = 0x12000, scoped, tag = 'internal scratch']
  %s0 = inlined_call_operand.vmem [shape: f32[8,64], index: 0, kind: input, shape index: {}]
  %s1 = inlined_call_operand.vmem [shape: f32[8,64], index: 1, kind: input, shape index: {}]
  %s2 = inlined_call_operand.vmem [shape: f32[128,64], index: 2, kind: input, shape index: {}]
  %s3 = inlined_call_operand.hbm [shape: f32[8,128], index: 3, kind: output, shape index: {}]
  %s4 = sld [smem:[#allocation0]]
  $region22: #{_rcomplex_forward.3} parent=0
    _
  %s6 = ssub.s32 1, %s4
  %s7 = scalar_select 0, %s6, %s4
  $region1: #{_rcomplex_forward.3} parent=0
    #allocation2 [shape = 'u8[4096]{0}', space=vmem, size = 0x1000, scoped, tag = 'output window, operand 0, single buffered']
    #allocation3 [shape = 's32[1]{0}', space=sflag, size = 0x4, scoped, tag = 'scoped memory for _rcomplex_forward.3']
    %8 = vsyncpa [#allocation3], 0
    // Predicated region
    $region2: #{_rcomplex_forward.3} parent=1 // pred_check
      _
    $region3: #{_rcomplex_forward.3} parent=1 // pred_check_branch
      %10 = sbr.rel (0) target = $region5
    $region4: #{_rcomplex_forward.3} parent=1 // pred_region
      _
    $region5: #{_rcomplex_forward.3} parent=1 // pred_fallthru
      _
    // Predicated region
    $region6: #{_rcomplex_forward.3} parent=1 // pred_check
      _
    $region7: #{_rcomplex_forward.3} parent=1 // pred_check_branch
      %12 = sbr.rel (0) target = $region9
    $region8: #{_rcomplex_forward.3} parent=1 // pred_region
      _
    $region9: #{_rcomplex_forward.3} parent=1 // pred_fallthru
      _
    // Predicated region
    $region10: #{_rcomplex_forward.3} parent=1 // pred_check
      _
    $region11: #{_rcomplex_forward.3} parent=1 // pred_check_branch
      %14 = sbr.rel (0) target = $region13
    $region12: #{_rcomplex_forward.3} parent=1 // pred_region
      _
    $region13: #{_rcomplex_forward.3} parent=1 // pred_fallthru
      _
    %v15 = vld [vmem:[%s0] sm:$0xff]
    %v16 = vld [vmem:[%s1] sm:$0xff]
    %v17 = vmul.f32 %v15, %v16
    %19 = vrot.lane.b32.xlu0 %v17, 96
    %v20 = vpop.permute.xlu0 %19
    %v22 = vsub.f32 %v17, %v20
    %24 = vrot.lane.b32.xlu0 %v16, 32
    %v25 = vpop.permute.xlu0 %24
    %v27 = vmul.f32 %v15, %v25
    %28 = vrot.lane.b32.xlu0 %v16, 96
    %v29 = vpop.permute.xlu0 %28
    %v31 = vmul.f32 %v15, %v29
    %33 = vrot.lane.b32.xlu0 %v31, 32
    %v34 = vpop.permute.xlu0 %33
    %v36 = vadd.f32 %v27, %v34
    %vm37 = vcmask 261120
    %v38 = vsel %vm37, %v22, %v36
    %v39 = vld [vmem:[%s2] sm:$0xff]
    %v40 = vld [vmem:[%s2 + $0x8] sm:$0xff]
    %v41 = vld [vmem:[%s2 + $0x10] sm:$0xff]
    %v42 = vld [vmem:[%s2 + $0x18] sm:$0xff]
    %v43 = vld [vmem:[%s2 + $0x20] sm:$0xff]
    %v44 = vld [vmem:[%s2 + $0x28] sm:$0xff]
    %v45 = vld [vmem:[%s2 + $0x30] sm:$0xff]
    %v46 = vld [vmem:[%s2 + $0x38] sm:$0xff]
    %v47 = vld [vmem:[%s2 + $0x40] sm:$0xff]
    %v48 = vld [vmem:[%s2 + $0x48] sm:$0xff]
    %v49 = vld [vmem:[%s2 + $0x50] sm:$0xff]
    %v50 = vld [vmem:[%s2 + $0x58] sm:$0xff]
    %v51 = vld [vmem:[%s2 + $0x60] sm:$0xff]
    %v52 = vld [vmem:[%s2 + $0x68] sm:$0xff]
    %v53 = vld [vmem:[%s2 + $0x70] sm:$0xff]
    %v54 = vld [vmem:[%s2 + $0x78] sm:$0xff]
    %vm55 = vcmask 523264
    %v57 = vsel %vm55, %v38, 0
    %v60 = vsel %vm55, %v39, 0
    %v63 = vsel %vm55, %v40, 0
    %v66 = vsel %vm55, %v41, 0
    %v69 = vsel %vm55, %v42, 0
    %v72 = vsel %vm55, %v43, 0
    %v75 = vsel %vm55, %v44, 0
    %v78 = vsel %vm55, %v45, 0
    %v81 = vsel %vm55, %v46, 0
    %v84 = vsel %vm55, %v47, 0
    %v87 = vsel %vm55, %v48, 0
    %v90 = vsel %vm55, %v49, 0
    %v93 = vsel %vm55, %v50, 0
    %v96 = vsel %vm55, %v51, 0
    %v99 = vsel %vm55, %v52, 0
    %v102 = vsel %vm55, %v53, 0
    %v105 = vsel %vm55, %v54, 0
    %107 = vmatprep.subr.mxu0 0.0
    %108 = vmatpush1.xpose.msra.mxu0 %v60
    %109 = vmatprep.subr.mxu0 0.0
    %110 = vmatpush1.xpose.msra.mxu0 %v63
    %111 = vmatprep.subr.mxu0 0.0
    %112 = vmatpush1.xpose.msra.mxu0 %v66
    %113 = vmatprep.subr.mxu0 0.0
    %114 = vmatpush1.xpose.msra.mxu0 %v69
    %115 = vmatprep.subr.mxu0 0.0
    %116 = vmatpush1.xpose.msra.mxu0 %v72
    %117 = vmatprep.subr.mxu0 0.0
    %118 = vmatpush1.xpose.msra.mxu0 %v75
    %119 = vmatprep.subr.mxu0 0.0
    %120 = vmatpush1.xpose.msra.mxu0 %v78
    %121 = vmatprep.subr.mxu0 0.0
    %122 = vmatpush1.xpose.msra.mxu0 %v81
    %123 = vmatprep.subr.mxu0 0.0
    %124 = vmatpush1.xpose.msra.mxu0 %v84
    %125 = vmatprep.subr.mxu0 0.0
    %126 = vmatpush1.xpose.msra.mxu0 %v87
    %127 = vmatprep.subr.mxu0 0.0
    %128 = vmatpush1.xpose.msra.mxu0 %v90
    %129 = vmatprep.subr.mxu0 0.0
    %130 = vmatpush1.xpose.msra.mxu0 %v93
    %131 = vmatprep.subr.mxu0 0.0
    %132 = vmatpush1.xpose.msra.mxu0 %v96
    %133 = vmatprep.subr.mxu0 0.0
    %134 = vmatpush1.xpose.msra.mxu0 %v99
    %135 = vmatprep.subr.mxu0 0.0
    %136 = vmatpush1.xpose.msra.mxu0 %v102
    %137 = vmatprep.subr.mxu0 0.0
    %138 = vmatpush1.xpose.msra.mxu0 %v105
    %139 = vmatprep.subr.mxu0 0.0
    %140 = vmatpush1.xpose.msra.mxu0 0.0
    %141 = vmatprep.subr.mxu0 0.0
    %142 = vmatpush1.xpose.msra.mxu0 0.0
    %143 = vmatprep.subr.mxu0 0.0
    %144 = vmatpush1.xpose.msra.mxu0 0.0
    %145 = vmatprep.subr.mxu0 0.0
    %146 = vmatpush1.xpose.msra.mxu0 0.0
    %147 = vmatprep.subr.mxu0 0.0
    %148 = vmatpush1.xpose.msra.mxu0 0.0
    %149 = vmatprep.subr.mxu0 0.0
    %150 = vmatpush1.xpose.msra.mxu0 0.0
    %151 = vmatprep.subr.mxu0 0.0
    %152 = vmatpush1.xpose.msra.mxu0 0.0
    %153 = vmatprep.subr.mxu0 0.0
    %154 = vmatpush1.xpose.msra.mxu0 0.0
    %155 = vmatprep.subr.mxu0 0.0
    %156 = vmatpush1.xpose.msra.mxu0 0.0
    %157 = vmatprep.subr.mxu0 0.0
    %158 = vmatpush1.xpose.msra.mxu0 0.0
    %159 = vmatprep.subr.mxu0 0.0
    %160 = vmatpush1.xpose.msra.mxu0 0.0
    %161 = vmatprep.subr.mxu0 0.0
    %162 = vmatpush1.xpose.msra.mxu0 0.0
    %163 = vmatprep.subr.mxu0 0.0
    %164 = vmatpush1.xpose.msra.mxu0 0.0
    %165 = vmatprep.subr.mxu0 0.0
    %166 = vmatpush1.xpose.msra.mxu0 0.0
    %167 = vmatprep.subr.mxu0 0.0
    %168 = vmatpush1.xpose.msra.mxu0 0.0
    %169 = vmatprep.subr.mxu0 0.0
    %170 = vmatpush1.xpose.msra.mxu0 0.0
    %171 = vmatprep.mubr.f32.mxu0 0.0
    %172 = vmatmul.mubr.f32.gmra.mrb[0].mxu0 %v57
    %v173 = vpop.f32.mrb[0].mxu0
    %v174 = vadd.f32 0.0, %v173
    %v175 = vpop.f32.mrb[0].mxu0
    %176 = vdwg.mxu0
    %177 = vst [vmem:[#allocation2] sm:$0xff] %v174
    // Predicated region
    $region14: #{_rcomplex_forward.3} parent=1 // pred_check
      _
    $region15: #{_rcomplex_forward.3} parent=1 // pred_check_branch
      %179 = sbr.rel (0) target = $region17
    $region16: #{_rcomplex_forward.3} parent=1 // pred_region
      %s181 = ssub.s32 128, 128
      %182 = vsyncadd [#allocation3], %s181
      %s184 = sshll.u32 [#allocation2], 4
      %s185 = int_to_ptr.vmem [resolvable:$true] %s184
      %187 = dma.vmem_to_hbm [thread:$0]  %s185, 128, %s3, [#allocation3]
    $region17: #{_rcomplex_forward.3} parent=1 // pred_fallthru
      _
    // Predicated region
    $region18: #{_rcomplex_forward.3} parent=1 // pred_check
      _
    $region19: #{_rcomplex_forward.3} parent=1 // pred_check_branch
      %189 = sbr.rel (0) target = $region21
    $region20: #{_rcomplex_forward.3} parent=1 // pred_region
      %190 = dma.done [#allocation3], 128
    $region21: #{_rcomplex_forward.3} parent=1 // pred_fallthru
      _
    %191 = vsyncpa [#allocation3], 1

</llo_original>
